<compile_context>
chip_gen: v7x
topology: tpu7x:2x2x1
jax: 0.10.0
libtpu: 0.0.40
codegen_flags: <defaults>
</compile_context>

<pallas_src>
import functools

import jax
import jax.numpy as jnp
from jax import lax
from jax.experimental import pallas as pl
from jax.experimental.pallas import tpu as pltpu

LANES = 128
TILE_ROWS_MAX = 4096  # 4096 * 128 * 4 B = 2 MiB per f32 input tile


def _bcemse_partial_kernel(x_ref, t_ref, sse_ref, bce_ref, *,
                           tile_rows, n_valid, num_blocks, mask_needed):
    i = pl.program_id(0)

    x = x_ref[...].astype(jnp.float32)
    t = t_ref[...].astype(jnp.float32)

    # MSE term.
    d = x - t
    sq = d * d

    # BCEWithLogits term, numerically stable form:
    #   max(x, 0) - x*t + log(1 + exp(-|x|))
    bce = jnp.maximum(x, 0.0) - x * t + jnp.log(1.0 + jnp.exp(-jnp.abs(x)))

    def write(sq_v, bce_v):
        # Per-block per-lane partial sums: sublane (XLU) reduce once per block,
        # keep lanes intact; cross-lane reduce happens in the wrapper.
        sse_ref[...] = jnp.sum(sq_v, axis=0, keepdims=True).reshape(1, 1, LANES)
        bce_ref[...] = jnp.sum(bce_v, axis=0, keepdims=True).reshape(1, 1, LANES)

    if not mask_needed:
        # Static: the padded slab covers the grid exactly and there is no lane
        # pad, so every element of every block is valid.
        write(sq, bce)
    else:
        is_last = i == num_blocks - 1

        @pl.when(jnp.logical_not(is_last))
        def _():
            write(sq, bce)

        @pl.when(is_last)
        def _():
            # Global flat element index of every entry in this tile; mask the
            # padded / out-of-bounds tail so it contributes 0 to both sums.
            # (int32 indexing is fine for < 2^31 elements.)
            row_ids = lax.broadcasted_iota(jnp.int32, (tile_rows, LANES), 0)
            lane_ids = lax.broadcasted_iota(jnp.int32, (tile_rows, LANES), 1)
            flat_idx = (i * tile_rows + row_ids) * LANES + lane_ids
            valid = flat_idx < n_valid
            write(jnp.where(valid, sq, 0.0), jnp.where(valid, bce, 0.0))


@jax.jit
def bcemse_loss(x, target):
    """Equivalent of nn.MSELoss()(x, t) * 1000 + nn.BCEWithLogitsLoss()(x, t)."""
    assert x.shape == target.shape, (x.shape, target.shape)
    n_elems = x.size
    dtype_bytes = jnp.dtype(x.dtype).itemsize

    xf = x.reshape(-1)
    tf = target.reshape(-1)

    # Pad only to the next lane multiple (<= 127 elements); padded entries are
    # masked out inside the kernel's last-block path. Native dtype preserved.
    pad = (-n_elems) % LANES
    if pad:
        xf = jnp.pad(xf, (0, pad))
        tf = jnp.pad(tf, (0, pad))

    rows = xf.shape[0] // LANES
    x2 = xf.reshape(rows, LANES)
    t2 = tf.reshape(rows, LANES)

    # Full-dim tile for small inputs; otherwise 4096-row tiles (multiple of 8).
    tile_rows = min(TILE_ROWS_MAX, rows)
    num_blocks = pl.cdiv(rows, tile_rows)
    # Static: does the last block contain any padded / out-of-bounds elements?
    mask_needed = (num_blocks * tile_rows * LANES) != n_elems

    kernel = functools.partial(
        _bcemse_partial_kernel,
        tile_rows=tile_rows,
        n_valid=n_elems,
        num_blocks=num_blocks,
        mask_needed=mask_needed,
    )

    cost = pl.CostEstimate(
        flops=10 * n_elems,
        transcendentals=2 * n_elems,
        bytes_accessed=2 * n_elems * dtype_bytes + 2 * num_blocks * LANES * 4,
    )

    sse_part, bce_part = pl.pallas_call(
        kernel,
        grid=(num_blocks,),
        in_specs=[
            pl.BlockSpec((tile_rows, LANES), lambda i: (i, 0)),
            pl.BlockSpec((tile_rows, LANES), lambda i: (i, 0)),
        ],
        out_specs=[
            pl.BlockSpec((1, 1, LANES), lambda i: (i, 0, 0)),
            pl.BlockSpec((1, 1, LANES), lambda i: (i, 0, 0)),
        ],
        out_shape=[
            jax.ShapeDtypeStruct((num_blocks, 1, LANES), jnp.float32),
            jax.ShapeDtypeStruct((num_blocks, 1, LANES), jnp.float32),
        ],
        compiler_params=pltpu.CompilerParams(
            dimension_semantics=("parallel",),  # independent per-block partials
        ),
        cost_estimate=cost,
    )(x2, t2)

    inv_n = jnp.float32(1.0 / n_elems)
    mse = jnp.sum(sse_part) * inv_n
    bce = jnp.sum(bce_part) * inv_n
    return mse * jnp.float32(1000.0) + bce


def _ref_loss(x, t):
    x32 = x.astype(jnp.float32)
    t32 = t.astype(jnp.float32)
    mse = jnp.mean((x32 - t32) ** 2)
    bce = jnp.mean(
        jnp.maximum(x32, 0.0) - x32 * t32 + jnp.log(1.0 + jnp.exp(-jnp.abs(x32)))
    )
    return mse * 1000.0 + bce


if __name__ == "__main__":
    key = jax.random.PRNGKey(0)
    k1, k2, k3, k4, k5, k6 = jax.random.split(key, 6)

    # Primary small case, NCHW like a deconvolution output: logits + [0,1] targets.
    x = jax.random.normal(k1, (2, 4, 16, 16), dtype=jnp.float32)
    t = jax.random.uniform(k2, (2, 4, 16, 16), dtype=jnp.float32)
    out = jax.block_until_ready(bcemse_loss(x, t))
    ref = _ref_loss(x, t)
    assert jnp.allclose(out, ref, rtol=1e-4, atol=1e-3), (out, ref)

    # Ragged case (size not a multiple of 128) exercises the in-kernel mask.
    xr = jax.random.normal(k3, (2, 3, 17, 19), dtype=jnp.float32)
    tr = jax.random.uniform(k4, (2, 3, 17, 19), dtype=jnp.float32)
    out_r = jax.block_until_ready(bcemse_loss(xr, tr))
    ref_r = _ref_loss(xr, tr)
    assert jnp.allclose(out_r, ref_r, rtol=1e-4, atol=1e-3), (out_r, ref_r)

    # Multi-block case with a partial boundary block (rows % tile_rows != 0):
    # interior block takes the maskless fast path, last block is masked.
    xb = jax.random.normal(k5, (4, 4, 64, 640), dtype=jnp.float32)
    tb = jax.random.uniform(k6, (4, 4, 64, 640), dtype=jnp.float32)
    out_b = jax.block_until_ready(bcemse_loss(xb, tb))
    ref_b = _ref_loss(xb, tb)
    assert jnp.allclose(out_b, ref_b, rtol=1e-4, atol=1e-3), (out_b, ref_b)

    print("KERNEL_OK")
</pallas_src>

<mosaic_0001>
module attributes {stable_mosaic.version = 11 : i64} {
  func.func @_bcemse_partial_kernel(%arg0: i32, %arg1: memref<16x128xf32, #tpu.memory_space<vmem>>, %arg2: memref<16x128xf32, #tpu.memory_space<vmem>>, %arg3: memref<1x1x128xf32, #tpu.memory_space<vmem>>, %arg4: memref<1x1x128xf32, #tpu.memory_space<vmem>>) attributes {dimension_semantics = [#tpu.dimension_semantics<parallel>], iteration_bounds = array<i64: 1>, scalar_prefetch = 0 : i64, scratch_operands = 0 : i64, tpu.core_type = #tpu.core_type<tc>, window_params = [{transform_indices = @transform_0, window_bounds = array<i64: 16, 128>}, {transform_indices = @transform_1, window_bounds = array<i64: 16, 128>}, {transform_indices = @transform_2, window_bounds = array<i64: 1, 1, 128>}, {transform_indices = @transform_3, window_bounds = array<i64: 1, 1, 128>}]} {
    %c0 = arith.constant 0 : index
    %c0_0 = arith.constant 0 : index
    %0 = vector.load %arg1[%c0, %c0_0] : memref<16x128xf32, #tpu.memory_space<vmem>>, vector<16x128xf32>
    %c0_1 = arith.constant 0 : index
    %c0_2 = arith.constant 0 : index
    %1 = vector.load %arg2[%c0_1, %c0_2] : memref<16x128xf32, #tpu.memory_space<vmem>>, vector<16x128xf32>
    %2 = arith.subf %0, %1 : vector<16x128xf32>
    %3 = arith.mulf %2, %2 : vector<16x128xf32>
    %cst = arith.constant 0.000000e+00 : f32
    %4 = vector.broadcast %cst : f32 to vector<16x128xf32>
    %5 = arith.maximumf %0, %4 : vector<16x128xf32>
    %6 = arith.mulf %0, %1 : vector<16x128xf32>
    %7 = arith.subf %5, %6 : vector<16x128xf32>
    %8 = math.absf %0 : vector<16x128xf32>
    %cst_3 = arith.constant 0.000000e+00 : f32
    %9 = vector.broadcast %cst_3 : f32 to vector<16x128xf32>
    %10 = arith.subf %9, %8 : vector<16x128xf32>
    %11 = math.exp %10 : vector<16x128xf32>
    %cst_4 = arith.constant 1.000000e+00 : f32
    %12 = vector.broadcast %cst_4 : f32 to vector<16x128xf32>
    %13 = arith.addf %12, %11 : vector<16x128xf32>
    %14 = math.log %13 : vector<16x128xf32>
    %15 = arith.addf %7, %14 : vector<16x128xf32>
    %cst_5 = arith.constant dense<0.000000e+00> : vector<128xf32>
    %16 = vector.multi_reduction <add>, %3, %cst_5 [0] : vector<16x128xf32> to vector<128xf32>
    %17 = vector.shape_cast %16 : vector<128xf32> to vector<1x128xf32>
    %18 = vector.shape_cast %17 : vector<1x128xf32> to vector<1x1x128xf32>
    %c0_6 = arith.constant 0 : index
    %c0_7 = arith.constant 0 : index
    %c0_8 = arith.constant 0 : index
    %19 = vector.load %arg3[%c0_6, %c0_7, %c0_8] : memref<1x1x128xf32, #tpu.memory_space<vmem>>, vector<1x1x128xf32>
    tpu.vector_store %arg3[%c0_6, %c0_7, %c0_8], %18 {strides = array<i32>} : memref<1x1x128xf32, #tpu.memory_space<vmem>>, vector<1x1x128xf32>,
    %cst_9 = arith.constant dense<0.000000e+00> : vector<128xf32>
    %20 = vector.multi_reduction <add>, %15, %cst_9 [0] : vector<16x128xf32> to vector<128xf32>
    %21 = vector.shape_cast %20 : vector<128xf32> to vector<1x128xf32>
    %22 = vector.shape_cast %21 : vector<1x128xf32> to vector<1x1x128xf32>
    %c0_10 = arith.constant 0 : index
    %c0_11 = arith.constant 0 : index
    %c0_12 = arith.constant 0 : index
    %23 = vector.load %arg4[%c0_10, %c0_11, %c0_12] : memref<1x1x128xf32, #tpu.memory_space<vmem>>, vector<1x1x128xf32>
    tpu.vector_store %arg4[%c0_10, %c0_11, %c0_12], %22 {strides = array<i32>} : memref<1x1x128xf32, #tpu.memory_space<vmem>>, vector<1x1x128xf32>,
    return
  }
  func.func @transform_0(%arg0: i32) -> (i32, i32) {
    %c0_i32 = arith.constant 0 : i32
    %c0_i32_0 = arith.constant 0 : i32
    return %arg0, %c0_i32 : i32, i32
  }
  func.func @transform_1(%arg0: i32) -> (i32, i32) {
    %c0_i32 = arith.constant 0 : i32
    %c0_i32_0 = arith.constant 0 : i32
    return %arg0, %c0_i32 : i32, i32
  }
  func.func @transform_2(%arg0: i32) -> (i32, i32, i32) {
    %c0_i32 = arith.constant 0 : i32
    %c0_i32_0 = arith.constant 0 : i32
    %c0_i32_1 = arith.constant 0 : i32
    return %arg0, %c0_i32, %c0_i32_0 : i32, i32, i32
  }
  func.func @transform_3(%arg0: i32) -> (i32, i32, i32) {
    %c0_i32 = arith.constant 0 : i32
    %c0_i32_0 = arith.constant 0 : i32
    %c0_i32_1 = arith.constant 0 : i32
    return %arg0, %c0_i32, %c0_i32_0 : i32, i32, i32
  }
}

</mosaic_0001>

<llo_original>
// kernel: bcemse_loss.1
$region0: #{bcemse_loss.1}
  #allocation0 [shape = 'u32[]', space=smem, size = 0x4, offset = 0x4, fixed_abs, tag = 'smem constant byte address 0x4 - core index']
  #allocation1 [shape = 'u32[144,128]{1,0:T(1,128)}', space=vmem, size = 0x12000, scoped, tag = 'internal scratch']
  %s0 = inlined_call_operand.vmem [shape: f32[16,128], index: 0, kind: input, shape index: {}]
  %s1 = inlined_call_operand.vmem [shape: f32[16,128], index: 1, kind: input, shape index: {}]
  %s2 = inlined_call_operand.vmem [shape: f32[1,1,128], index: 2, kind: output, shape index: {0}]
  %s3 = inlined_call_operand.vmem [shape: f32[1,1,128], index: 3, kind: output, shape index: {1}]
  %4 = xla_tuple %s2, %s3
  %s5 = sld [smem:[#allocation0]]
  $region26: #{bcemse_loss.1} parent=0
    _
  %s7 = ssub.s32 1, %s5
  %s8 = scalar_select 0, %s7, %s5
  // Predicated region
  $region2: #{bcemse_loss.1} parent=0 // pred_check
    _
  $region3: #{bcemse_loss.1} parent=0 // pred_check_branch
    %10 = sbr.rel (0) target = $region5
  $region4: #{bcemse_loss.1} parent=0 // pred_region
    _
  $region5: #{bcemse_loss.1} parent=0 // pred_fallthru
    _
  // Predicated region
  $region6: #{bcemse_loss.1} parent=0 // pred_check
    _
  $region7: #{bcemse_loss.1} parent=0 // pred_check_branch
    %12 = sbr.rel (0) target = $region9
  $region8: #{bcemse_loss.1} parent=0 // pred_region
    _
  $region9: #{bcemse_loss.1} parent=0 // pred_fallthru
    _
  %v13 = vld [vmem:[%s0] sm:$0xff]
  %v14 = vld [vmem:[%s0 + $0x8] sm:$0xff]
  %v15 = vld [vmem:[%s1] sm:$0xff]
  %v16 = vld [vmem:[%s1 + $0x8] sm:$0xff]
  %v17 = vsub.f32 %v13, %v15
  %v18 = vsub.f32 %v14, %v16
  %v19 = vmul.f32 %v17, %v17
  %v20 = vmul.f32 %v18, %v18
  %v21 = vmax.f32 %v13, 0.0
  %v22 = vmax.f32 %v14, 0.0
  %v23 = vmul.f32 %v13, %v15
  %v24 = vmul.f32 %v14, %v16
  %v25 = vsub.f32 %v21, %v23
  %v26 = vsub.f32 %v22, %v24
  %v27 = vand.u32 2147483647, %v13
  %v28 = vand.u32 2147483647, %v14
  %v29 = vsub.f32 0.0, %v27
  %v30 = vsub.f32 0.0, %v28
  %v31 = vmul.f32 %v29, 1.442695
  %v32 = vpow.pop %v31
  %v33 = vmul.f32 %v30, 1.442695
  %v34 = vpow.pop %v33
  %v35 = vadd.f32 %v32, 1.0
  %v36 = vadd.f32 %v34, 1.0
  %v37 = vlog2.pop %v35
  %v38 = vmul.f32 %v37, 0.6931472
  %v39 = vlog2.pop %v36
  %v40 = vmul.f32 %v39, 0.6931472
  %v41 = vadd.f32 %v25, %v38
  %v42 = vadd.f32 %v26, %v40
  %v43 = vadd.f32 %v19, %v20
  %v44 = vrot.slane %v43, 4
  %v45 = vadd.f32 %v43, %v44
  %v46 = vrot.slane %v45, 2
  %v47 = vadd.f32 %v45, %v46
  %v48 = vrot.slane %v47, 1
  %v49 = vadd.f32 %v47, %v48
  %50 = vst [vmem:[%s2] sm:$0x1] %v49
  %v51 = vadd.f32 %v41, %v42
  %v52 = vrot.slane %v51, 4
  %v53 = vadd.f32 %v51, %v52
  %v54 = vrot.slane %v53, 2
  %v55 = vadd.f32 %v53, %v54
  %v56 = vrot.slane %v55, 1
  %v57 = vadd.f32 %v55, %v56
  %58 = vst [vmem:[%s3] sm:$0x1] %v57
  // Predicated region
  $region10: #{bcemse_loss.1} parent=0 // pred_check
    _
  $region11: #{bcemse_loss.1} parent=0 // pred_check_branch
    %60 = sbr.rel (0) target = $region13
  $region12: #{bcemse_loss.1} parent=0 // pred_region
    _
  $region13: #{bcemse_loss.1} parent=0 // pred_fallthru
    _
  // Predicated region
  $region14: #{bcemse_loss.1} parent=0 // pred_check
    _
  $region15: #{bcemse_loss.1} parent=0 // pred_check_branch
    %62 = sbr.rel (0) target = $region17
  $region16: #{bcemse_loss.1} parent=0 // pred_region
    _
  $region17: #{bcemse_loss.1} parent=0 // pred_fallthru
    _
  // Predicated region
  $region18: #{bcemse_loss.1} parent=0 // pred_check
    _
  $region19: #{bcemse_loss.1} parent=0 // pred_check_branch
    %64 = sbr.rel (0) target = $region21
  $region20: #{bcemse_loss.1} parent=0 // pred_region
    _
  $region21: #{bcemse_loss.1} parent=0 // pred_fallthru
    _
  // Predicated region
  $region22: #{bcemse_loss.1} parent=0 // pred_check
    _
  $region23: #{bcemse_loss.1} parent=0 // pred_check_branch
    %66 = sbr.rel (0) target = $region25
  $region24: #{bcemse_loss.1} parent=0 // pred_region
    _
  $region25: #{bcemse_loss.1} parent=0 // pred_fallthru
    _

</llo_original>
